<compile_context>
chip_gen: v7x
topology: tpu7x:2x2x1
jax: 0.10.0
libtpu: 0.0.40
codegen_flags: <defaults>
</compile_context>

<pallas_src>
import math

import jax
import jax.numpy as jnp
from jax.experimental import pallas as pl
from jax.experimental.pallas import tpu as pltpu

ALPHA = 0.5                      # leaky-ReLU flow negative slope (>0 => invertible)
INV_ALPHA = 1.0 / ALPHA
LOG_ALPHA = math.log(ALPHA)


# ---------------------------------------------------------------------------
# Pallas kernels
# ---------------------------------------------------------------------------
def _compose_fwd_kernel(x_ref, e1_ref, b1_ref, e2_ref, b2_ref,
                        y_ref, logd_ref, acc_ref):
    j = pl.program_id(1)

    @pl.when(j == 0)
    def _():
        acc_ref[...] = jnp.zeros_like(acc_ref)

    x = x_ref[...]                       # (tile_B, tile_D) f32
    e1 = e1_ref[...]                     # (1, tile_D) exp(s1), pre-broadcast
    b1 = b1_ref[...]
    e2 = e2_ref[...]
    b2 = b2_ref[...]

    # flow 0: affine (scale precomputed in wrapper)
    y = x * e1 + b1
    # flow 1: leaky-ReLU flow; count negatives for logdet
    neg = y < 0.0
    y = jnp.where(neg, y * ALPHA, y)
    acc_ref[...] += jnp.sum(neg.astype(jnp.float32), axis=-1, keepdims=True)
    # flow 2: affine
    y = y * e2 + b2
    y_ref[...] = y

    @pl.when(j == pl.num_programs(1) - 1)
    def _():
        logd_ref[...] = acc_ref[...] * LOG_ALPHA


def _compose_inv_kernel(z_ref, e1i_ref, b1_ref, e2i_ref, b2_ref,
                        y_ref, logd_ref, acc_ref):
    j = pl.program_id(1)

    @pl.when(j == 0)
    def _():
        acc_ref[...] = jnp.zeros_like(acc_ref)

    z = z_ref[...]
    e1i = e1i_ref[...]                   # (1, tile_D) exp(-s1), pre-broadcast
    b1 = b1_ref[...]
    e2i = e2i_ref[...]
    b2 = b2_ref[...]

    # flow 2 inverse
    y = (z - b2) * e2i
    # flow 1 inverse (sign preserved since ALPHA > 0); multiply, don't divide
    neg = y < 0.0
    y = jnp.where(neg, y * INV_ALPHA, y)
    acc_ref[...] += jnp.sum(neg.astype(jnp.float32), axis=-1, keepdims=True)
    # flow 0 inverse
    y = (y - b1) * e1i
    y_ref[...] = y

    @pl.when(j == pl.num_programs(1) - 1)
    def _():
        logd_ref[...] = -(acc_ref[...] * LOG_ALPHA)


# ---------------------------------------------------------------------------
# Wrapper (glue: padding, param expansion, constant logdet terms)
# ---------------------------------------------------------------------------
def _round_up(x, m):
    return ((x + m - 1) // m) * m


def compose_flow(x_nchw, s1, b1, s2, b2, *, aux=None, inverse=False):
    del aux  # unused by these flows (Compose just threads it through)
    B, C, H, W = x_nchw.shape
    HW = H * W
    D = C * HW

    # ---- tile sizes (lane-dense D tiles, sublane-aligned B tiles) ----------
    tile_D = min(512, _round_up(D, 128))
    D_pad = _round_up(D, tile_D)
    tile_B = min(256, _round_up(B, 8))
    B_pad = _round_up(B, tile_B)

    xf = x_nchw.reshape(B, D).astype(jnp.float32)
    if (B_pad, D_pad) != (B, D):
        xf = jnp.pad(xf, ((0, B_pad - B), (0, D_pad - D)))

    # Per-channel params -> per-element (1, D_pad) rows (row-major NCHW flatten).
    # Padded lanes: scale=1, bias=0 so padded data stays zero and contributes
    # nothing to the neg-count logdet term.
    def expand(row_c, pad_value):
        row = jnp.repeat(row_c.astype(jnp.float32), HW)
        if D_pad != D:
            row = jnp.pad(row, (0, D_pad - D), constant_values=pad_value)
        return row.reshape(1, D_pad)

    s1f = s1.astype(jnp.float32)
    s2f = s2.astype(jnp.float32)
    if inverse:
        scale1 = expand(jnp.exp(-s1f), 1.0)
        scale2 = expand(jnp.exp(-s2f), 1.0)
    else:
        scale1 = expand(jnp.exp(s1f), 1.0)
        scale2 = expand(jnp.exp(s2f), 1.0)
    bias1 = expand(b1, 0.0)
    bias2 = expand(b2, 0.0)

    kernel = _compose_inv_kernel if inverse else _compose_fwd_kernel
    grid = (B_pad // tile_B, D_pad // tile_D)

    cost = pl.CostEstimate(
        flops=6 * B_pad * D_pad,
        transcendentals=0,
        bytes_accessed=(2 * B_pad * D_pad + 4 * D_pad + B_pad) * 4,
    )

    y, ld_neg = pl.pallas_call(
        kernel,
        out_shape=(
            jax.ShapeDtypeStruct((B_pad, D_pad), jnp.float32),
            jax.ShapeDtypeStruct((B_pad, 1), jnp.float32),
        ),
        grid=grid,
        in_specs=[
            pl.BlockSpec((tile_B, tile_D), lambda i, j: (i, j)),
            pl.BlockSpec((1, tile_D), lambda i, j: (0, j)),
            pl.BlockSpec((1, tile_D), lambda i, j: (0, j)),
            pl.BlockSpec((1, tile_D), lambda i, j: (0, j)),
            pl.BlockSpec((1, tile_D), lambda i, j: (0, j)),
        ],
        out_specs=(
            pl.BlockSpec((tile_B, tile_D), lambda i, j: (i, j)),
            pl.BlockSpec((tile_B, 1), lambda i, j: (i, 0)),
        ),
        scratch_shapes=[pltpu.VMEM((tile_B, 1), jnp.float32)],
        compiler_params=pltpu.CompilerParams(
            dimension_semantics=("parallel", "arbitrary"),
        ),
        cost_estimate=cost,
    )(xf, scale1, bias1, scale2, bias2)

    y_out = y[:B, :D].reshape(B, C, H, W)
    ld = ld_neg[:B, 0]

    # data-independent affine log-det terms, hoisted out of the kernel
    const = (jnp.sum(s1f) + jnp.sum(s2f)) * float(HW)
    ld = ld - const if inverse else ld + const
    return y_out, ld


# ---------------------------------------------------------------------------
# Pure-JAX reference of the same composed flow (for correctness check)
# ---------------------------------------------------------------------------
def compose_flow_ref(x_nchw, s1, b1, s2, b2, *, inverse=False):
    B, C, H, W = x_nchw.shape
    s1b = s1.reshape(1, C, 1, 1)
    b1b = b1.reshape(1, C, 1, 1)
    s2b = s2.reshape(1, C, 1, 1)
    b2b = b2.reshape(1, C, 1, 1)
    x = x_nchw.astype(jnp.float32)
    ld = jnp.zeros((B,), jnp.float32)
    if not inverse:
        y = x * jnp.exp(s1b) + b1b
        ld = ld + jnp.sum(s1) * (H * W)
        neg = y < 0.0
        y = jnp.where(neg, y * ALPHA, y)
        ld = ld + jnp.sum(jnp.where(neg, LOG_ALPHA, 0.0), axis=(1, 2, 3))
        y = y * jnp.exp(s2b) + b2b
        ld = ld + jnp.sum(s2) * (H * W)
    else:
        y = (x - b2b) * jnp.exp(-s2b)
        ld = ld - jnp.sum(s2) * (H * W)
        neg = y < 0.0
        y = jnp.where(neg, y / ALPHA, y)
        ld = ld - jnp.sum(jnp.where(neg, LOG_ALPHA, 0.0), axis=(1, 2, 3))
        y = (y - b1b) * jnp.exp(-s1b)
        ld = ld - jnp.sum(s1) * (H * W)
    return y, ld


# ---------------------------------------------------------------------------
if __name__ == "__main__":
    key = jax.random.PRNGKey(0)
    kx, k1, k2, k3, k4 = jax.random.split(key, 5)

    B, C, H, W = 2, 4, 16, 16
    x = jax.random.normal(kx, (B, C, H, W), dtype=jnp.float32)

    # deterministic per-channel flow parameters (ActNorm-style affine flows)
    s1 = 0.1 * jax.random.normal(k1, (C,), dtype=jnp.float32)
    b1 = 0.1 * jax.random.normal(k2, (C,), dtype=jnp.float32)
    s2 = 0.1 * jax.random.normal(k3, (C,), dtype=jnp.float32)
    b2 = 0.1 * jax.random.normal(k4, (C,), dtype=jnp.float32)

    # forward direction (x -> z)
    z, logd = compose_flow(x, s1, b1, s2, b2, aux=None, inverse=False)
    jax.block_until_ready((z, logd))

    z_ref, logd_ref = compose_flow_ref(x, s1, b1, s2, b2, inverse=False)
    assert z.shape == (B, C, H, W) and logd.shape == (B,)
    assert jnp.allclose(z, z_ref, atol=1e-5, rtol=1e-5)
    assert jnp.allclose(logd, logd_ref, atol=1e-4, rtol=1e-5)

    # inverse direction round-trip: Compose(reversed flows) should invert exactly
    x_back, logd_inv = compose_flow(z, s1, b1, s2, b2, aux=None, inverse=True)
    jax.block_until_ready((x_back, logd_inv))
    assert jnp.allclose(x_back, x, atol=1e-4, rtol=1e-4)
    assert jnp.allclose(logd + logd_inv, jnp.zeros((B,)), atol=1e-3)

    print("KERNEL_OK")
</pallas_src>

<mosaic_0001>
module attributes {stable_mosaic.version = 11 : i64} {
  func.func @_compose_fwd_kernel(%arg0: i32, %arg1: i32, %arg2: memref<8x512xf32, #tpu.memory_space<vmem>>, %arg3: memref<1x512xf32, #tpu.memory_space<vmem>>, %arg4: memref<1x512xf32, #tpu.memory_space<vmem>>, %arg5: memref<1x512xf32, #tpu.memory_space<vmem>>, %arg6: memref<1x512xf32, #tpu.memory_space<vmem>>, %arg7: memref<8x512xf32, #tpu.memory_space<vmem>>, %arg8: memref<8x1xf32, #tpu.memory_space<vmem>>, %arg9: memref<8x1xf32, #tpu.memory_space<vmem>>) attributes {dimension_semantics = [#tpu.dimension_semantics<parallel>, #tpu.dimension_semantics<arbitrary>], iteration_bounds = array<i64: 1, 2>, scalar_prefetch = 0 : i64, scratch_operands = 1 : i64, tpu.core_type = #tpu.core_type<tc>, window_params = [{transform_indices = @transform_0, window_bounds = array<i64: 8, 512>}, {transform_indices = @transform_1, window_bounds = array<i64: 1, 512>}, {transform_indices = @transform_2, window_bounds = array<i64: 1, 512>}, {transform_indices = @transform_3, window_bounds = array<i64: 1, 512>}, {transform_indices = @transform_4, window_bounds = array<i64: 1, 512>}, {transform_indices = @transform_5, window_bounds = array<i64: 8, 512>}, {transform_indices = @transform_6, window_bounds = array<i64: 8, 1>}]} {
    %c0_i32 = arith.constant 0 : i32
    %0 = arith.cmpi eq, %arg1, %c0_i32 : i32
    %1 = arith.extui %0 : i1 to i32
    %c0_i32_0 = arith.constant 0 : i32
    %2 = arith.cmpi ne, %1, %c0_i32_0 : i32
    scf.if %2 {
      %cst_19 = arith.constant 0.000000e+00 : f32
      %32 = vector.broadcast %cst_19 : f32 to vector<8x1xf32>
      %c0_20 = arith.constant 0 : index
      %c0_21 = arith.constant 0 : index
      %33 = vector.load %arg9[%c0_20, %c0_21] : memref<8x1xf32, #tpu.memory_space<vmem>>, vector<8x1xf32>
      tpu.vector_store %arg9[%c0_20, %c0_21], %32 {strides = array<i32>} : memref<8x1xf32, #tpu.memory_space<vmem>>, vector<8x1xf32>,
    } else {
    }
    %c0 = arith.constant 0 : index
    %c0_1 = arith.constant 0 : index
    %3 = vector.load %arg2[%c0, %c0_1] : memref<8x512xf32, #tpu.memory_space<vmem>>, vector<8x512xf32>
    %c0_2 = arith.constant 0 : index
    %c0_3 = arith.constant 0 : index
    %4 = vector.load %arg3[%c0_2, %c0_3] : memref<1x512xf32, #tpu.memory_space<vmem>>, vector<1x512xf32>
    %c0_4 = arith.constant 0 : index
    %c0_5 = arith.constant 0 : index
    %5 = vector.load %arg4[%c0_4, %c0_5] : memref<1x512xf32, #tpu.memory_space<vmem>>, vector<1x512xf32>
    %c0_6 = arith.constant 0 : index
    %c0_7 = arith.constant 0 : index
    %6 = vector.load %arg5[%c0_6, %c0_7] : memref<1x512xf32, #tpu.memory_space<vmem>>, vector<1x512xf32>
    %c0_8 = arith.constant 0 : index
    %c0_9 = arith.constant 0 : index
    %7 = vector.load %arg6[%c0_8, %c0_9] : memref<1x512xf32, #tpu.memory_space<vmem>>, vector<1x512xf32>
    %8 = vector.broadcast %4 : vector<1x512xf32> to vector<8x512xf32>
    %9 = arith.mulf %3, %8 : vector<8x512xf32>
    %10 = vector.broadcast %5 : vector<1x512xf32> to vector<8x512xf32>
    %11 = arith.addf %9, %10 : vector<8x512xf32>
    %cst = arith.constant 0.000000e+00 : f32
    %12 = vector.broadcast %cst : f32 to vector<8x512xf32>
    %13 = arith.cmpf olt, %11, %12 : vector<8x512xf32>
    %cst_10 = arith.constant 5.000000e-01 : f32
    %14 = vector.broadcast %cst_10 : f32 to vector<8x512xf32>
    %15 = arith.mulf %11, %14 : vector<8x512xf32>
    %16 = arith.select %13, %15, %11 : vector<8x512xi1>, vector<8x512xf32>
    %c0_11 = arith.constant 0 : index
    %c0_12 = arith.constant 0 : index
    %17 = vector.load %arg9[%c0_11, %c0_12] : memref<8x1xf32, #tpu.memory_space<vmem>>, vector<8x1xf32>
    %18 = arith.extui %13 : vector<8x512xi1> to vector<8x512xi32>
    %19 = arith.sitofp %18 : vector<8x512xi32> to vector<8x512xf32>
    %cst_13 = arith.constant dense<0.000000e+00> : vector<8xf32>
    %20 = vector.multi_reduction <add>, %19, %cst_13 [1] : vector<8x512xf32> to vector<8xf32>
    %21 = vector.shape_cast %20 : vector<8xf32> to vector<8x1xf32>
    %22 = arith.addf %17, %21 : vector<8x1xf32>
    %c0_14 = arith.constant 0 : index
    %c0_15 = arith.constant 0 : index
    %23 = vector.load %arg9[%c0_14, %c0_15] : memref<8x1xf32, #tpu.memory_space<vmem>>, vector<8x1xf32>
    tpu.vector_store %arg9[%c0_14, %c0_15], %22 {strides = array<i32>} : memref<8x1xf32, #tpu.memory_space<vmem>>, vector<8x1xf32>,
    %24 = vector.broadcast %6 : vector<1x512xf32> to vector<8x512xf32>
    %25 = arith.mulf %16, %24 : vector<8x512xf32>
    %26 = vector.broadcast %7 : vector<1x512xf32> to vector<8x512xf32>
    %27 = arith.addf %25, %26 : vector<8x512xf32>
    %c0_16 = arith.constant 0 : index
    %c0_17 = arith.constant 0 : index
    %28 = vector.load %arg7[%c0_16, %c0_17] : memref<8x512xf32, #tpu.memory_space<vmem>>, vector<8x512xf32>
    tpu.vector_store %arg7[%c0_16, %c0_17], %27 {strides = array<i32>} : memref<8x512xf32, #tpu.memory_space<vmem>>, vector<8x512xf32>,
    %c1_i32 = arith.constant 1 : i32
    %29 = arith.cmpi eq, %arg1, %c1_i32 : i32
    %30 = arith.extui %29 : i1 to i32
    %c0_i32_18 = arith.constant 0 : i32
    %31 = arith.cmpi ne, %30, %c0_i32_18 : i32
    scf.if %31 {
      %c0_19 = arith.constant 0 : index
      %c0_20 = arith.constant 0 : index
      %32 = vector.load %arg9[%c0_19, %c0_20] : memref<8x1xf32, #tpu.memory_space<vmem>>, vector<8x1xf32>
      %cst_21 = arith.constant -0.693147182 : f32
      %33 = vector.broadcast %cst_21 : f32 to vector<8x1xf32>
      %34 = arith.mulf %32, %33 : vector<8x1xf32>
      %c0_22 = arith.constant 0 : index
      %c0_23 = arith.constant 0 : index
      %35 = vector.load %arg8[%c0_22, %c0_23] : memref<8x1xf32, #tpu.memory_space<vmem>>, vector<8x1xf32>
      tpu.vector_store %arg8[%c0_22, %c0_23], %34 {strides = array<i32>} : memref<8x1xf32, #tpu.memory_space<vmem>>, vector<8x1xf32>,
    } else {
    }
    return
  }
  func.func @transform_0(%arg0: i32, %arg1: i32) -> (i32, i32) {
    %c0_i32 = arith.constant 0 : i32
    return %arg0, %arg1 : i32, i32
  }
  func.func @transform_1(%arg0: i32, %arg1: i32) -> (i32, i32) {
    %c0_i32 = arith.constant 0 : i32
    %c0_i32_0 = arith.constant 0 : i32
    return %c0_i32, %arg1 : i32, i32
  }
  func.func @transform_2(%arg0: i32, %arg1: i32) -> (i32, i32) {
    %c0_i32 = arith.constant 0 : i32
    %c0_i32_0 = arith.constant 0 : i32
    return %c0_i32, %arg1 : i32, i32
  }
  func.func @transform_3(%arg0: i32, %arg1: i32) -> (i32, i32) {
    %c0_i32 = arith.constant 0 : i32
    %c0_i32_0 = arith.constant 0 : i32
    return %c0_i32, %arg1 : i32, i32
  }
  func.func @transform_4(%arg0: i32, %arg1: i32) -> (i32, i32) {
    %c0_i32 = arith.constant 0 : i32
    %c0_i32_0 = arith.constant 0 : i32
    return %c0_i32, %arg1 : i32, i32
  }
  func.func @transform_5(%arg0: i32, %arg1: i32) -> (i32, i32) {
    %c0_i32 = arith.constant 0 : i32
    return %arg0, %arg1 : i32, i32
  }
  func.func @transform_6(%arg0: i32, %arg1: i32) -> (i32, i32) {
    %c0_i32 = arith.constant 0 : i32
    %c0_i32_0 = arith.constant 0 : i32
    return %arg0, %c0_i32 : i32, i32
  }
}

</mosaic_0001>

<llo_original>
// kernel: tpu_custom_call.1
$region0: #{tpu_custom_call.1}
  #allocation0 [shape = 'u32[]', space=smem, size = 0x4, offset = 0x4, fixed_abs, tag = 'smem constant byte address 0x4 - core index']
  #allocation1 [shape = 'u32[144,128]{1,0:T(1,128)}', space=vmem, size = 0x12000, scoped, tag = 'internal scratch']
  #allocation2 [shape = 'f32[8,1]{1,0:T(8,128)}', space=vmem, size = 0x1000, scoped, tag = 'scratch operand']
  %s0 = inlined_call_operand.hbm [shape: f32[8,1024], index: 0, kind: input, shape index: {}]
  %s1 = inlined_call_operand.hbm [shape: f32[1,1024], index: 1, kind: input, shape index: {}]
  %s2 = inlined_call_operand.hbm [shape: f32[1,1024], index: 2, kind: input, shape index: {}]
  %s3 = inlined_call_operand.vmem [shape: f32[1,1024], index: 3, kind: input, shape index: {}]
  %s4 = inlined_call_operand.hbm [shape: f32[1,1024], index: 4, kind: input, shape index: {}]
  %s5 = inlined_call_operand.hbm [shape: f32[8,1024], index: 5, kind: output, shape index: {0}]
  %s6 = inlined_call_operand.vmem [shape: f32[8,1], index: 6, kind: output, shape index: {1}]
  %7 = xla_tuple %s5, %s6
  %s8 = sld [smem:[#allocation0]]
  $region85: #{tpu_custom_call.1} parent=0
    _
  %s10 = ssub.s32 1, %s8
  %s11 = scalar_select 0, %s10, %s8
  $region1: #{tpu_custom_call.1} parent=0
    #allocation3 [shape = 'u8[32768]{0}', space=vmem, size = 0x8000, scoped, tag = 'input window, operand 0']
    #allocation4 [shape = 's32[2]{0}', space=sflag, size = 0x8, scoped, tag = 'scoped memory for tpu_custom_call.1']
    #allocation5 [shape = 's32[2]{0}', space=sflag, size = 0x8, scoped, tag = 'scoped memory for tpu_custom_call.1']
    #allocation6 [shape = 'u8[4096]{0}', space=vmem, size = 0x1000, scoped, tag = 'input window, operand 1']
    #allocation7 [shape = 's32[2]{0}', space=sflag, size = 0x8, scoped, tag = 'scoped memory for tpu_custom_call.1']
    #allocation8 [shape = 'u8[4096]{0}', space=vmem, size = 0x1000, scoped, tag = 'input window, operand 2']
    #allocation9 [shape = 'u8[4096]{0}', space=vmem, size = 0x1000, scoped, tag = 'input window, operand 4']
    #allocation10 [shape = 's32[2]{0}', space=sflag, size = 0x8, scoped, tag = 'scoped memory for tpu_custom_call.1']
    #allocation11 [shape = 'u8[32768]{0}', space=vmem, size = 0x8000, scoped, tag = 'output window, operand 0']
    %12 = vsyncpa [#allocation4], 0
    %s13 = scalar_lea.sflag [#allocation4], 1
    %14 = vsyncpa %s13, 0
    %15 = vsyncpa [#allocation7], 0
    %s16 = scalar_lea.sflag [#allocation7], 1
    %17 = vsyncpa %s16, 0
    %18 = vsyncpa [#allocation10], 0
    %s19 = scalar_lea.sflag [#allocation10], 1
    %20 = vsyncpa %s19, 0
    %21 = vsyncpa [#allocation5], 0
    %s22 = scalar_lea.sflag [#allocation5], 1
    %23 = vsyncpa %s22, 0
    loop: start=0, step=1, limit=4
    $region2: #{tpu_custom_call.1} parent=1 // loop_pre_header
      _
    $region3: #{tpu_custom_call.1} parent=1 // loop_header
      %s25 = sphi 0, %s29
      %p26 = scmp.ge.s32.totalorder %s25, 4
      %s32 = sphi 0, %s44
      %s33 = sphi 0, %s40
      %s34 = sphi 0, %s32
      %s35 = sphi 0, %s33
      %s36 = sphi 0, %s34
      %s37 = sphi 0, %s35
      %s49 = sphi 0, %s51
      %s52 = sphi 0, %s49
      %s53 = sphi 0, %s52
      %s69 = sphi 0, %s53
      %s75 = sphi 0, %s77
      %s78 = sphi 0, %s75
      %s79 = sphi 0, %s78
      %s95 = sphi 0, %s79
      %s101 = sphi 0, %s103
      %s104 = sphi 0, %s101
      %s105 = sphi 0, %s104
      %s121 = sphi 0, %s105
      %s127 = sphi 0, %s129
      %s130 = sphi 0, %s127
      %s131 = sphi 0, %s130
      %s147 = sphi 0, %s131
      %s153 = sphi 0, %s155
      %s156 = sphi 0, %s153
      %s157 = sphi 0, %s156
      %s173 = sphi 0, %s157
      %s181 = sphi 0, %s183
      %s184 = sphi 0, %s181
      %s185 = sphi 0, %s184
      %s201 = sphi 0, %s185
      %s207 = sphi 0, %s209
      %s210 = sphi 0, %s207
      %s211 = sphi 0, %s210
      %s227 = sphi 0, %s211
    $region4: #{tpu_custom_call.1} parent=1 // loop_header_branch
      %28 = sbr.rel (%p26) target = $region8
    $region5: #{tpu_custom_call.1} parent=1 // loop_body
      %s30 = ssub.s32 %s25, 1
      %s31 = ssub.s32 %s25, 2
      %s38 = sadd.s32 1, %s33
      %p39 = scmp.ge.s32.totalorder %s38, 2
      %s40 = scalar_select %p39, 0, %s38
      %s41 = sadd.s32 1, %s32
      %s42 = scalar_select %p39, %s41, %s32
      %p43 = scmp.ge.s32.totalorder %s42, 1
      %s44 = scalar_select %p43, 0, %s42
      %s45 = ssub.s32 %s32, %s44
      %s46 = ssub.s32 %s33, %s40
      %s47 = sor.u32 %s45, %s46
      %p48 = scmp.eq.s32.totalorder %s47, 0
      %s50 = sadd.s32 %s49, 1
      %s51 = scalar_select %p48, %s49, %s50
      %p54 = pneg %p48
      %p55 = scmp.eq.s32.totalorder %s25, 1
      %p56 = por %p54, %p55
      %p57 = scmp.ne.s32.totalorder %s49, %s52
      %p58 = scmp.eq.s32.totalorder %s25, 0
      %p59 = por %p57, %p58
      %p60 = scmp.ne.s32.totalorder %s49, %s52
      %p61 = scmp.eq.s32.totalorder %s30, 1
      %p62 = por %p60, %p61
      %p63 = scmp.ne.s32.totalorder %s52, %s53
      %p64 = scmp.eq.s32.totalorder %s30, 0
      %p65 = por %p63, %p64
      %p66 = scmp.ne.s32.totalorder %s52, %s53
      %p67 = scmp.eq.s32.totalorder %s31, 1
      %p68 = por %p66, %p67
      %p70 = scmp.ne.s32.totalorder %s53, %s69
      %p71 = scmp.eq.s32.totalorder %s31, 0
      %p72 = por %p70, %p71
      %s73 = ssub.s32 %s33, %s40
      %p74 = scmp.eq.s32.totalorder %s73, 0
      %s76 = sadd.s32 %s75, 1
      %s77 = scalar_select %p74, %s75, %s76
      %p80 = pneg %p74
      %p81 = scmp.eq.s32.totalorder %s25, 1
      %p82 = por %p80, %p81
      %p83 = scmp.ne.s32.totalorder %s75, %s78
      %p84 = scmp.eq.s32.totalorder %s25, 0
      %p85 = por %p83, %p84
      %p86 = scmp.ne.s32.totalorder %s75, %s78
      %p87 = scmp.eq.s32.totalorder %s30, 1
      %p88 = por %p86, %p87
      %p89 = scmp.ne.s32.totalorder %s78, %s79
      %p90 = scmp.eq.s32.totalorder %s30, 0
      %p91 = por %p89, %p90
      %p92 = scmp.ne.s32.totalorder %s78, %s79
      %p93 = scmp.eq.s32.totalorder %s31, 1
      %p94 = por %p92, %p93
      %p96 = scmp.ne.s32.totalorder %s79, %s95
      %p97 = scmp.eq.s32.totalorder %s31, 0
      %p98 = por %p96, %p97
      %s99 = ssub.s32 %s33, %s40
      %p100 = scmp.eq.s32.totalorder %s99, 0
      %s102 = sadd.s32 %s101, 1
      %s103 = scalar_select %p100, %s101, %s102
      %p106 = pneg %p100
      %p107 = scmp.eq.s32.totalorder %s25, 1
      %p108 = por %p106, %p107
      %p109 = scmp.ne.s32.totalorder %s101, %s104
      %p110 = scmp.eq.s32.totalorder %s25, 0
      %p111 = por %p109, %p110
      %p112 = scmp.ne.s32.totalorder %s101, %s104
      %p113 = scmp.eq.s32.totalorder %s30, 1
      %p114 = por %p112, %p113
      %p115 = scmp.ne.s32.totalorder %s104, %s105
      %p116 = scmp.eq.s32.totalorder %s30, 0
      %p117 = por %p115, %p116
      %p118 = scmp.ne.s32.totalorder %s104, %s105
      %p119 = scmp.eq.s32.totalorder %s31, 1
      %p120 = por %p118, %p119
      %p122 = scmp.ne.s32.totalorder %s105, %s121
      %p123 = scmp.eq.s32.totalorder %s31, 0
      %p124 = por %p122, %p123
      %s125 = ssub.s32 %s33, %s40
      %p126 = scmp.eq.s32.totalorder %s125, 0
      %s128 = sadd.s32 %s127, 1
      %s129 = scalar_select %p126, %s127, %s128
      %p132 = pneg %p126
      %p133 = scmp.eq.s32.totalorder %s25, 1
      %p134 = por %p132, %p133
      %p135 = scmp.ne.s32.totalorder %s127, %s130
      %p136 = scmp.eq.s32.totalorder %s25, 0
      %p137 = por %p135, %p136
      %p138 = scmp.ne.s32.totalorder %s127, %s130
      %p139 = scmp.eq.s32.totalorder %s30, 1
      %p140 = por %p138, %p139
      %p141 = scmp.ne.s32.totalorder %s130, %s131
      %p142 = scmp.eq.s32.totalorder %s30, 0
      %p143 = por %p141, %p142
      %p144 = scmp.ne.s32.totalorder %s130, %s131
      %p145 = scmp.eq.s32.totalorder %s31, 1
      %p146 = por %p144, %p145
      %p148 = scmp.ne.s32.totalorder %s131, %s147
      %p149 = scmp.eq.s32.totalorder %s31, 0
      %p150 = por %p148, %p149
      %s151 = ssub.s32 %s33, %s40
      %p152 = scmp.eq.s32.totalorder %s151, 0
      %s154 = sadd.s32 %s153, 1
      %s155 = scalar_select %p152, %s153, %s154
      %p158 = pneg %p152
      %p159 = scmp.eq.s32.totalorder %s25, 1
      %p160 = por %p158, %p159
      %p161 = scmp.ne.s32.totalorder %s153, %s156
      %p162 = scmp.eq.s32.totalorder %s25, 0
      %p163 = por %p161, %p162
      %p164 = scmp.ne.s32.totalorder %s153, %s156
      %p165 = scmp.eq.s32.totalorder %s30, 1
      %p166 = por %p164, %p165
      %p167 = scmp.ne.s32.totalorder %s156, %s157
      %p168 = scmp.eq.s32.totalorder %s30, 0
      %p169 = por %p167, %p168
      %p170 = scmp.ne.s32.totalorder %s156, %s157
      %p171 = scmp.eq.s32.totalorder %s31, 1
      %p172 = por %p170, %p171
      %p174 = scmp.ne.s32.totalorder %s157, %s173
      %p175 = scmp.eq.s32.totalorder %s31, 0
      %p176 = por %p174, %p175
      %s177 = ssub.s32 %s32, %s44
      %s178 = ssub.s32 %s33, %s40
      %s179 = sor.u32 %s177, %s178
      %p180 = scmp.eq.s32.totalorder %s179, 0
      %s182 = sadd.s32 %s181, 1
      %s183 = scalar_select %p180, %s181, %s182
      %p186 = pneg %p180
      %p187 = scmp.eq.s32.totalorder %s25, 1
      %p188 = por %p186, %p187
      %p189 = scmp.ne.s32.totalorder %s181, %s184
      %p190 = scmp.eq.s32.totalorder %s25, 0
      %p191 = por %p189, %p190
      %p192 = scmp.ne.s32.totalorder %s181, %s184
      %p193 = scmp.eq.s32.totalorder %s30, 1
      %p194 = por %p192, %p193
      %p195 = scmp.ne.s32.totalorder %s184, %s185
      %p196 = scmp.eq.s32.totalorder %s30, 0
      %p197 = por %p195, %p196
      %p198 = scmp.ne.s32.totalorder %s184, %s185
      %p199 = scmp.eq.s32.totalorder %s31, 1
      %p200 = por %p198, %p199
      %p202 = scmp.ne.s32.totalorder %s185, %s201
      %p203 = scmp.eq.s32.totalorder %s31, 0
      %p204 = por %p202, %p203
      %s205 = ssub.s32 %s32, %s44
      %p206 = scmp.eq.s32.totalorder %s205, 0
      %s208 = sadd.s32 %s207, 1
      %s209 = scalar_select %p206, %s207, %s208
      %p212 = pneg %p206
      %p213 = scmp.eq.s32.totalorder %s25, 1
      %p214 = por %p212, %p213
      %p215 = scmp.ne.s32.totalorder %s207, %s210
      %p216 = scmp.eq.s32.totalorder %s25, 0
      %p217 = por %p215, %p216
      %p218 = scmp.ne.s32.totalorder %s207, %s210
      %p219 = scmp.eq.s32.totalorder %s30, 1
      %p220 = por %p218, %p219
      %p221 = scmp.ne.s32.totalorder %s210, %s211
      %p222 = scmp.eq.s32.totalorder %s30, 0
      %p223 = por %p221, %p222
      %p224 = scmp.ne.s32.totalorder %s210, %s211
      %p225 = scmp.eq.s32.totalorder %s31, 1
      %p226 = por %p224, %p225
      %p228 = scmp.ne.s32.totalorder %s211, %s227
      %p229 = scmp.eq.s32.totalorder %s31, 0
      %p230 = por %p228, %p229
      %p231 = scmp.le.s32.totalorder 1, %s25
      %p232 = scmp.lt.s32.totalorder %s25, 3
      %p233 = pnand %p231, %p232
      %p234 = pneg %p233
      // Predicated region
      $region9: #{tpu_custom_call.1} parent=5 // pred_check
        _
      $region10: #{tpu_custom_call.1} parent=5 // pred_check_branch
        %236 = sbr.rel (%p233) target = $region12
      $region11: #{tpu_custom_call.1} parent=5 // pred_region
        %s237 = ssub.s32 %s25, 1
      $region12: #{tpu_custom_call.1} parent=5 // pred_fallthru
        _
      %p238 = scmp.lt.s32.totalorder %s25, 2
      // Predicated region
      $region13: #{tpu_custom_call.1} parent=5 // pred_check
        %p239 = pneg %p238
      $region14: #{tpu_custom_call.1} parent=5 // pred_check_branch
        %241 = sbr.rel (%p239) target = $region16
      $region15: #{tpu_custom_call.1} parent=5 // pred_region
        // Predicated region
        $region17: #{tpu_custom_call.1} parent=15 // pred_check
          %p242 = pneg %p59
        $region18: #{tpu_custom_call.1} parent=15 // pred_check_branch
          %244 = sbr.rel (%p242) target = $region20
        $region19: #{tpu_custom_call.1} parent=15 // pred_region
          %s245 = sand.u32 %s49, 1
          %s246 = scalar_lea.sflag [#allocation4], %s245
          %s247 = sand.u32 %s49, 1
          %s248 = smul.addr %s247, 32
          %s249 = scalar_lea.vmem [#allocation3], %s248
          %s250 = smul.u32 4, %s33
          %s252 = ssub.s32 512, 512
          %253 = vsyncadd %s246, %s252
          %s254 = smul.addr %s32, 8
          %s255 = sadd.s32 %s250, %s254
          %s256 = smul.addr %s255, 128
          %s257 = scalar_lea.hbm %s0, %s256
          %s259 = sshll.u32 %s249, 4
          %s260 = int_to_ptr.vmem [resolvable:$true] %s259
          %262 = dma.hbm_to_vmem [thread:$0]  %s257, 512, %s260, %s246
        $region20: #{tpu_custom_call.1} parent=15 // pred_fallthru
          _
        // Predicated region
        $region21: #{tpu_custom_call.1} parent=15 // pred_check
          %p263 = pneg %p85
        $region22: #{tpu_custom_call.1} parent=15 // pred_check_branch
          %265 = sbr.rel (%p263) target = $region24
        $region23: #{tpu_custom_call.1} parent=15 // pred_region
          %s266 = sand.u32 %s25, 1
          %s267 = scalar_lea.sflag [#allocation7], %s266
          %s268 = sand.u32 %s75, 1
          %s269 = smul.addr %s268, 4
          %s270 = scalar_lea.vmem [#allocation6], %s269
          %s271 = smul.u32 4, %s33
          %s273 = ssub.s32 64, 64
          %274 = vsyncadd %s267, %s273
          %s275 = smul.addr %s271, 16
          %s276 = scalar_lea.hbm %s1, %s275
          %s278 = sshll.u32 %s270, 4
          %s279 = int_to_ptr.vmem [resolvable:$true] %s278
          %281 = dma.hbm_to_vmem [thread:$0]  %s276, 64, %s279, %s267
        $region24: #{tpu_custom_call.1} parent=15 // pred_fallthru
          _
        // Predicated region
        $region25: #{tpu_custom_call.1} parent=15 // pred_check
          %p282 = pneg %p111
        $region26: #{tpu_custom_call.1} parent=15 // pred_check_branch
          %284 = sbr.rel (%p282) target = $region28
        $region27: #{tpu_custom_call.1} parent=15 // pred_region
          %s285 = sand.u32 %s25, 1
          %s286 = scalar_lea.sflag [#allocation7], %s285
          %s287 = sand.u32 %s101, 1
          %s288 = smul.addr %s287, 4
          %s289 = scalar_lea.vmem [#allocation8], %s288
          %s290 = smul.u32 4, %s33
          %s292 = ssub.s32 64, 64
          %293 = vsyncadd %s286, %s292
          %s294 = smul.addr %s290, 16
          %s295 = scalar_lea.hbm %s2, %s294
          %s297 = sshll.u32 %s289, 4
          %s298 = int_to_ptr.vmem [resolvable:$true] %s297
          %300 = dma.hbm_to_vmem [thread:$0]  %s295, 64, %s298, %s286
        $region28: #{tpu_custom_call.1} parent=15 // pred_fallthru
          _
        // Predicated region
        $region29: #{tpu_custom_call.1} parent=15 // pred_check
          %p301 = pneg %p137
        $region30: #{tpu_custom_call.1} parent=15 // pred_check_branch
          %303 = sbr.rel (%p301) target = $region32
        $region31: #{tpu_custom_call.1} parent=15 // pred_region
          %s304 = smul.u32 4, %s33
          %p305 = scmp.lt.s32.totalorder %s304, 7
          %s306 = scalar_select %p305, %s304, 7
          %s307 = scalar_lea.vmem %s3, %s306
          %s308 = smul.u32 4, %s33
        $region32: #{tpu_custom_call.1} parent=15 // pred_fallthru
          _
        // Predicated region
        $region33: #{tpu_custom_call.1} parent=15 // pred_check
          %p309 = pneg %p163
        $region34: #{tpu_custom_call.1} parent=15 // pred_check_branch
          %311 = sbr.rel (%p309) target = $region36
        $region35: #{tpu_custom_call.1} parent=15 // pred_region
          %s312 = sand.u32 %s153, 1
          %s313 = scalar_lea.sflag [#allocation10], %s312
          %s314 = sand.u32 %s153, 1
          %s315 = smul.addr %s314, 4
          %s316 = scalar_lea.vmem [#allocation9], %s315
          %s317 = smul.u32 4, %s33
          %s319 = ssub.s32 64, 64
          %320 = vsyncadd %s313, %s319
          %s321 = smul.addr %s317, 16
          %s322 = scalar_lea.hbm %s4, %s321
          %s324 = sshll.u32 %s316, 4
          %s325 = int_to_ptr.vmem [resolvable:$true] %s324
          %327 = dma.hbm_to_vmem [thread:$0]  %s322, 64, %s325, %s313
        $region36: #{tpu_custom_call.1} parent=15 // pred_fallthru
          _
      $region16: #{tpu_custom_call.1} parent=5 // pred_fallthru
        _
      %p328 = scmp.le.s32.totalorder 1, %s25
      %p329 = scmp.lt.s32.totalorder %s25, 3
      %p330 = pnand %p328, %p329
      %p331 = pneg %p330
      // Predicated region
      $region37: #{tpu_custom_call.1} parent=5 // pred_check
        _
      $region38: #{tpu_custom_call.1} parent=5 // pred_check_branch
        %333 = sbr.rel (%p330) target = $region40
      $region39: #{tpu_custom_call.1} parent=5 // pred_region
        %s334 = ssub.s32 %s25, 1
        %s335 = sand.u32 %s52, 1
        %s336 = scalar_lea.sflag [#allocation4], %s335
        %s337 = sand.u32 %s52, 1
        %s338 = smul.addr %s337, 32
        %s339 = scalar_lea.vmem [#allocation3], %s338
        // Predicated region
        $region41: #{tpu_custom_call.1} parent=39 // pred_check
          %p340 = pneg %p65
        $region42: #{tpu_custom_call.1} parent=39 // pred_check_branch
          %342 = sbr.rel (%p340) target = $region44
        $region43: #{tpu_custom_call.1} parent=39 // pred_region
          %343 = dma.done %s336, 512
        $region44: #{tpu_custom_call.1} parent=39 // pred_fallthru
          _
        %s344 = sand.u32 %s30, 1
        %s345 = scalar_lea.sflag [#allocation7], %s344
        %s346 = sand.u32 %s78, 1
        %s347 = smul.addr %s346, 4
        %s348 = scalar_lea.vmem [#allocation6], %s347
        // Predicated region
        $region45: #{tpu_custom_call.1} parent=39 // pred_check
          %p349 = pneg %p91
        $region46: #{tpu_custom_call.1} parent=39 // pred_check_branch
          %351 = sbr.rel (%p349) target = $region48
        $region47: #{tpu_custom_call.1} parent=39 // pred_region
          %352 = dma.done %s345, 64
        $region48: #{tpu_custom_call.1} parent=39 // pred_fallthru
          _
        %s353 = sand.u32 %s30, 1
        %s354 = scalar_lea.sflag [#allocation7], %s353
        %s355 = sand.u32 %s104, 1
        %s356 = smul.addr %s355, 4
        %s357 = scalar_lea.vmem [#allocation8], %s356
        // Predicated region
        $region49: #{tpu_custom_call.1} parent=39 // pred_check
          %p358 = pneg %p117
        $region50: #{tpu_custom_call.1} parent=39 // pred_check_branch
          %360 = sbr.rel (%p358) target = $region52
        $region51: #{tpu_custom_call.1} parent=39 // pred_region
          %361 = dma.done %s354, 64
        $region52: #{tpu_custom_call.1} parent=39 // pred_fallthru
          _
        %s362 = sand.u32 %s156, 1
        %s363 = scalar_lea.sflag [#allocation10], %s362
        %s364 = sand.u32 %s156, 1
        %s365 = smul.addr %s364, 4
        %s366 = scalar_lea.vmem [#allocation9], %s365
        // Predicated region
        $region53: #{tpu_custom_call.1} parent=39 // pred_check
          %p367 = pneg %p169
        $region54: #{tpu_custom_call.1} parent=39 // pred_check_branch
          %369 = sbr.rel (%p367) target = $region56
        $region55: #{tpu_custom_call.1} parent=39 // pred_region
          %370 = dma.done %s363, 64
        $region56: #{tpu_custom_call.1} parent=39 // pred_fallthru
          _
        %s371 = sand.u32 %s52, 1
        %s372 = scalar_lea.sflag [#allocation4], %s371
        %s373 = sand.u32 %s52, 1
        %s374 = smul.addr %s373, 32
        %s375 = scalar_lea.vmem [#allocation3], %s374
        %p376 = pneg %p65
        %p377 = pneg %p62
        %s378 = sand.u32 %s30, 1
        %s379 = scalar_lea.sflag [#allocation7], %s378
        %s380 = sand.u32 %s78, 1
        %s381 = smul.addr %s380, 4
        %s382 = scalar_lea.vmem [#allocation6], %s381
        %p383 = pneg %p91
        %p384 = pneg %p88
        %s385 = sand.u32 %s30, 1
        %s386 = scalar_lea.sflag [#allocation7], %s385
        %s387 = sand.u32 %s104, 1
        %s388 = smul.addr %s387, 4
        %s389 = scalar_lea.vmem [#allocation8], %s388
        %p390 = pneg %p117
        %p391 = pneg %p114
        %s392 = smul.u32 4, %s35
        %p393 = scmp.lt.s32.totalorder %s392, 7
        %s394 = scalar_select %p393, %s392, 7
        %s395 = scalar_lea.vmem %s3, %s394
        %p396 = pneg %p143
        %p397 = pneg %p140
        %s398 = sand.u32 %s156, 1
        %s399 = scalar_lea.sflag [#allocation10], %s398
        %s400 = sand.u32 %s156, 1
        %s401 = smul.addr %s400, 4
        %s402 = scalar_lea.vmem [#allocation9], %s401
        %p403 = pneg %p169
        %p404 = pneg %p166
        %p405 = pneg %p197
        %p406 = pneg %p194
        %s407 = sand.u32 %s184, 1
        %s408 = scalar_lea.sflag [#allocation5], %s407
        %s409 = sand.u32 %s184, 1
        %s410 = smul.addr %s409, 32
        %s411 = scalar_lea.vmem [#allocation11], %s410
        %p412 = pneg %p223
        %p413 = pneg %p220
        %p414 = scmp.lt.s32.totalorder %s34, 0
        %s415 = scalar_select %p414, %s34, 0
        %s416 = smul.addr %s415, 8
        %s417 = scalar_lea.vmem %s6, %s416
        %s418 = smul.u32 4, %s35
        %s419 = smul.u32 4, %s35
        %s420 = smul.u32 4, %s35
        %s421 = smul.u32 4, %s35
        %p422 = scmp.lt.s32.totalorder %s421, 7
        %s423 = scalar_select %p422, %s421, 7
        %s424 = scalar_lea.vmem %s3, %s423
        %s425 = smul.u32 4, %s35
        %s426 = smul.u32 4, %s35
        %s427 = smul.u32 4, %s35
        %p428 = scmp.lt.s32.totalorder %s34, 0
        %s429 = scalar_select %p428, %s34, 0
        %s430 = smul.addr %s429, 8
        %s431 = scalar_lea.vmem %s6, %s430
        %p432 = scmp.eq.s32.totalorder %s35, 0
        // Predicated region
        $region57: #{tpu_custom_call.1} parent=39 // pred_check
          %p433 = pneg %p432
        $region58: #{tpu_custom_call.1} parent=39 // pred_check_branch
          %435 = sbr.rel (%p433) target = $region60
        $region59: #{tpu_custom_call.1} parent=39 // pred_region
          %vm436 = vcmask 7168
          %437 = vst.msk [vmem:[#allocation2] sm:$0xff] %vm436, 0.0
        $region60: #{tpu_custom_call.1} parent=39 // pred_fallthru
          _
        %v438 = vld [vmem:[%s339] sm:$0xff]
        %v439 = vld [vmem:[%s339 + $0x8] sm:$0xff]
        %v440 = vld [vmem:[%s339 + $0x10] sm:$0xff]
        %v441 = vld [vmem:[%s339 + $0x18] sm:$0xff]
        %v442 = vld [vmem:[%s348] sm:$0xf]
        %v443 = vld [vmem:[%s357] sm:$0xf]
        %v444 = vld [vmem:[%s424] sm:$0xf]
        %v445 = vld [vmem:[%s366] sm:$0xf]
        %v447 = vlaneseq
        %v448 = vshrl.u32 %v447, 7
        %v449 = vsub.s32 0, %v448
        %v450 = vrot.slane %v442, %v449
        %v451 = vlaneseq
        %v452 = vshrl.u32 %v451, 7
        %v453 = vsub.s32 1, %v452
        %v454 = vrot.slane %v442, %v453
        %v455 = vlaneseq
        %v456 = vshrl.u32 %v455, 7
        %v457 = vsub.s32 2, %v456
        %v458 = vrot.slane %v442, %v457
        %v459 = vlaneseq
        %v460 = vshrl.u32 %v459, 7
        %v461 = vsub.s32 3, %v460
        %v462 = vrot.slane %v442, %v461
        %v467 = vmul.f32 %v438, %v450
        %v468 = vmul.f32 %v439, %v454
        %v469 = vmul.f32 %v440, %v458
        %v470 = vmul.f32 %v441, %v462
        %v472 = vlaneseq
        %v473 = vshrl.u32 %v472, 7
        %v474 = vsub.s32 0, %v473
        %v475 = vrot.slane %v443, %v474
        %v476 = vlaneseq
        %v477 = vshrl.u32 %v476, 7
        %v478 = vsub.s32 1, %v477
        %v479 = vrot.slane %v443, %v478
        %v480 = vlaneseq
        %v481 = vshrl.u32 %v480, 7
        %v482 = vsub.s32 2, %v481
        %v483 = vrot.slane %v443, %v482
        %v484 = vlaneseq
        %v485 = vshrl.u32 %v484, 7
        %v486 = vsub.s32 3, %v485
        %v487 = vrot.slane %v443, %v486
        %v492 = vadd.f32 %v467, %v475
        %v493 = vadd.f32 %v468, %v479
        %v494 = vadd.f32 %v469, %v483
        %v495 = vadd.f32 %v470, %v487
        %vm496 = vcmp.lt.f32.partialorder %v492, 0.0
        %vm497 = vcmp.lt.f32.partialorder %v493, 0.0
        %vm498 = vcmp.lt.f32.partialorder %v494, 0.0
        %vm499 = vcmp.lt.f32.partialorder %v495, 0.0
        %v500 = vmul.f32 %v492, 0.5
        %v501 = vmul.f32 %v493, 0.5
        %v502 = vmul.f32 %v494, 0.5
        %v503 = vmul.f32 %v495, 0.5
        %v504 = vsel %vm496, %v500, %v492
        %v505 = vsel %vm497, %v501, %v493
        %v506 = vsel %vm498, %v502, %v494
        %v507 = vsel %vm499, %v503, %v495
        %v508 = vld [vmem:[#allocation2] sm:$0xff]
        %v509 = vsel %vm496, 1, 0
        %v510 = vsel %vm497, 1, 0
        %v511 = vsel %vm498, 1, 0
        %v512 = vsel %vm499, 1, 0
        %v513 = vcvt.s32.f32 %v509
        %v514 = vcvt.s32.f32 %v510
        %v515 = vcvt.s32.f32 %v511
        %v516 = vcvt.s32.f32 %v512
        %v517 = vadd.f32 %v513, %v514
        %v518 = vadd.f32 %v517, %v515
        %v519 = vadd.f32 %v518, %v516
        %520 = vadd.xlane.f32.xlu0 %v519
        %v521 = vpop.xlane.xlu0 %520
        %v522 = vadd.f32 %v508, %v521
        %vm523 = vcmask 7168
        %524 = vst.msk [vmem:[#allocation2] sm:$0xff] %vm523, %v522
        %v526 = vlaneseq
        %v527 = vshrl.u32 %v526, 7
        %v528 = vsub.s32 0, %v527
        %v529 = vrot.slane %v444, %v528
        %v530 = vlaneseq
        %v531 = vshrl.u32 %v530, 7
        %v532 = vsub.s32 1, %v531
        %v533 = vrot.slane %v444, %v532
        %v534 = vlaneseq
        %v535 = vshrl.u32 %v534, 7
        %v536 = vsub.s32 2, %v535
        %v537 = vrot.slane %v444, %v536
        %v538 = vlaneseq
        %v539 = vshrl.u32 %v538, 7
        %v540 = vsub.s32 3, %v539
        %v541 = vrot.slane %v444, %v540
        %v546 = vmul.f32 %v504, %v529
        %v547 = vmul.f32 %v505, %v533
        %v548 = vmul.f32 %v506, %v537
        %v549 = vmul.f32 %v507, %v541
        %v551 = vlaneseq
        %v552 = vshrl.u32 %v551, 7
        %v553 = vsub.s32 0, %v552
        %v554 = vrot.slane %v445, %v553
        %v555 = vlaneseq
        %v556 = vshrl.u32 %v555, 7
        %v557 = vsub.s32 1, %v556
        %v558 = vrot.slane %v445, %v557
        %v559 = vlaneseq
        %v560 = vshrl.u32 %v559, 7
        %v561 = vsub.s32 2, %v560
        %v562 = vrot.slane %v445, %v561
        %v563 = vlaneseq
        %v564 = vshrl.u32 %v563, 7
        %v565 = vsub.s32 3, %v564
        %v566 = vrot.slane %v445, %v565
        %v571 = vadd.f32 %v546, %v554
        %v572 = vadd.f32 %v547, %v558
        %v573 = vadd.f32 %v548, %v562
        %v574 = vadd.f32 %v549, %v566
        %575 = vst [vmem:[%s411] sm:$0xff] %v571
        %576 = vst [vmem:[%s411 + $0x8] sm:$0xff] %v572
        %577 = vst [vmem:[%s411 + $0x10] sm:$0xff] %v573
        %578 = vst [vmem:[%s411 + $0x18] sm:$0xff] %v574
        %p579 = scmp.eq.s32.totalorder %s35, 1
        // Predicated region
        $region61: #{tpu_custom_call.1} parent=39 // pred_check
          %p580 = pneg %p579
        $region62: #{tpu_custom_call.1} parent=39 // pred_check_branch
          %582 = sbr.rel (%p580) target = $region64
        $region63: #{tpu_custom_call.1} parent=39 // pred_region
          %v583 = vld [vmem:[#allocation2] sm:$0xff]
          %v584 = vmul.f32 %v583, -0.6931472
          %585 = vst.msk [vmem:[%s431] sm:$0xff] %vm523, %v584
        $region64: #{tpu_custom_call.1} parent=39 // pred_fallthru
          _
        %s586 = sand.u32 %s184, 1
        %s587 = scalar_lea.sflag [#allocation5], %s586
        %s588 = sand.u32 %s184, 1
        %s589 = smul.addr %s588, 32
        %s590 = scalar_lea.vmem [#allocation11], %s589
        %p591 = scmp.lt.s32.totalorder %s34, 0
        %s592 = scalar_select %p591, %s34, 0
        %s593 = smul.addr %s592, 8
        %s594 = scalar_lea.vmem %s6, %s593
        // Predicated region
        $region65: #{tpu_custom_call.1} parent=39 // pred_check
          %p595 = pneg %p194
        $region66: #{tpu_custom_call.1} parent=39 // pred_check_branch
          %597 = sbr.rel (%p595) target = $region68
        $region67: #{tpu_custom_call.1} parent=39 // pred_region
          %s598 = smul.u32 4, %s35
          %s600 = ssub.s32 512, 512
          %601 = vsyncadd %s587, %s600
          %s602 = smul.addr %s34, 8
          %s603 = sadd.s32 %s598, %s602
          %s604 = smul.addr %s603, 128
          %s605 = scalar_lea.hbm %s5, %s604
          %s607 = sshll.u32 %s590, 4
          %s608 = int_to_ptr.vmem [resolvable:$true] %s607
          %610 = dma.vmem_to_hbm [thread:$0]  %s608, 512, %s605, %s587
        $region68: #{tpu_custom_call.1} parent=39 // pred_fallthru
          _
        // Predicated region
        $region69: #{tpu_custom_call.1} parent=39 // pred_check
          %p611 = pneg %p220
        $region70: #{tpu_custom_call.1} parent=39 // pred_check_branch
          %613 = sbr.rel (%p611) target = $region72
        $region71: #{tpu_custom_call.1} parent=39 // pred_region
          _
        $region72: #{tpu_custom_call.1} parent=39 // pred_fallthru
          _
        // Predicated region
        $region73: #{tpu_custom_call.1} parent=39 // pred_check
          %p614 = pneg %p220
        $region74: #{tpu_custom_call.1} parent=39 // pred_check_branch
          %616 = sbr.rel (%p614) target = $region76
        $region75: #{tpu_custom_call.1} parent=39 // pred_region
          %p617 = scmp.lt.s32.totalorder %s34, 0
          %s618 = scalar_select %p617, %s34, 0
          %s619 = smul.addr %s618, 8
          %s620 = scalar_lea.vmem %s6, %s619
        $region76: #{tpu_custom_call.1} parent=39 // pred_fallthru
          _
      $region40: #{tpu_custom_call.1} parent=5 // pred_fallthru
        _
      %p621 = scmp.le.s32.totalorder 2, %s25
      // Predicated region
      $region77: #{tpu_custom_call.1} parent=5 // pred_check
        %p622 = pneg %p621
      $region78: #{tpu_custom_call.1} parent=5 // pred_check_branch
        %624 = sbr.rel (%p622) target = $region80
      $region79: #{tpu_custom_call.1} parent=5 // pred_region
        %s625 = ssub.s32 %s25, 2
        // Predicated region
        $region81: #{tpu_custom_call.1} parent=79 // pred_check
          %p626 = pneg %p200
        $region82: #{tpu_custom_call.1} parent=79 // pred_check_branch
          %628 = sbr.rel (%p626) target = $region84
        $region83: #{tpu_custom_call.1} parent=79 // pred_region
          %s629 = sand.u32 %s185, 1
          %s630 = scalar_lea.sflag [#allocation5], %s629
          %s631 = sand.u32 %s185, 1
          %s632 = smul.addr %s631, 32
          %s633 = scalar_lea.vmem [#allocation11], %s632
          %634 = dma.done %s630, 512
        $region84: #{tpu_custom_call.1} parent=79 // pred_fallthru
          _
      $region80: #{tpu_custom_call.1} parent=5 // pred_fallthru
        _
    $region6: #{tpu_custom_call.1} parent=1 // loop_footer
      %s29 = sadd.s32 1, %s25
    $region7: #{tpu_custom_call.1} parent=1 // loop_footer_branch
      %24 = sbr.rel target = $region3
    $region8: #{tpu_custom_call.1} parent=1 // loop_exit
      _
    %635 = vsyncpa [#allocation4], 1
    %s636 = scalar_lea.sflag [#allocation4], 1
    %637 = vsyncpa %s636, 1
    %638 = vsyncpa [#allocation7], 1
    %s639 = scalar_lea.sflag [#allocation7], 1
    %640 = vsyncpa %s639, 1
    %641 = vsyncpa [#allocation10], 1
    %s642 = scalar_lea.sflag [#allocation10], 1
    %643 = vsyncpa %s642, 1
    %644 = vsyncpa [#allocation5], 1
    %s645 = scalar_lea.sflag [#allocation5], 1
    %646 = vsyncpa %s645, 1

</llo_original>
